<compile_context>
chip_gen: v7x
topology: tpu7x:2x2x1
jax: 0.10.0
libtpu: 0.0.40
codegen_flags: <defaults>
</compile_context>

<pallas_src>
import jax
import jax.numpy as jnp
from jax.experimental import pallas as pl
from jax.experimental.pallas import tpu as pltpu


def _agg_relations_kernel(x_ref, o_ref):
    # x_ref: (ROWS, K2, D) VMEM tile; o_ref: (ROWS, D)
    # Reduce over K2 on the VPU, accumulating in float32, cast on store.
    o_ref[...] = jnp.sum(x_ref[...], axis=1, dtype=jnp.float32).astype(o_ref.dtype)


def aggregation_relations(x, *, rows=512):
    """Sum over axis 2 of a (B, T, K2, D) tensor using a Pallas TPU kernel."""
    B, T, K2, D = x.shape
    N = B * T

    # Flatten (B, T) -> N rows; contiguous, so this is layout-free.
    x2 = x.reshape(N, K2, D)

    # Row-slab size: large enough to amortize per-step overhead, multiple of 8
    # for sublane-dense output stores (or the full extent when N is small).
    if N <= rows:
        row_block = N
    else:
        row_block = max(8, (rows // 8) * 8)

    grid = (pl.cdiv(N, row_block),)

    out = pl.pallas_call(
        _agg_relations_kernel,
        out_shape=jax.ShapeDtypeStruct((N, D), x.dtype),
        grid_spec=pl.GridSpec(
            grid=grid,
            in_specs=[
                pl.BlockSpec((row_block, K2, D), lambda i: (i, 0, 0)),
            ],
            out_specs=pl.BlockSpec((row_block, D), lambda i: (i, 0)),
        ),
        compiler_params=pltpu.CompilerParams(
            dimension_semantics=("parallel",),  # shard the row axis across TCs (v7x)
        ),
    )(x2)

    return out.reshape(B, T, D)


if __name__ == "__main__":
    # AggregationRelations has no parameters; only an input tensor is needed.
    key = jax.random.PRNGKey(0)
    B, T, K2, D = 2, 8, 9, 128  # K2 = K*K relational pairs, D = hidden
    x = jax.random.normal(key, (B, T, K2, D), dtype=jnp.float32)

    out = aggregation_relations(x)
    out = jax.block_until_ready(out)

    # Correctness check against plain JAX reference of torch.sum(x, 2)
    ref = jnp.sum(x, axis=2)
    assert out.shape == (B, T, D)
    assert jnp.allclose(out, ref, atol=1e-5, rtol=1e-5)

    print("KERNEL_OK")
</pallas_src>

<mosaic_0001>
module attributes {stable_mosaic.version = 11 : i64} {
  func.func @_agg_relations_kernel(%arg0: i32, %arg1: memref<16x9x128xf32, #tpu.memory_space<vmem>>, %arg2: memref<16x128xf32, #tpu.memory_space<vmem>>) attributes {dimension_semantics = [#tpu.dimension_semantics<parallel>], iteration_bounds = array<i64: 1>, scalar_prefetch = 0 : i64, scratch_operands = 0 : i64, tpu.core_type = #tpu.core_type<tc>, window_params = [{transform_indices = @transform_0, window_bounds = array<i64: 16, 9, 128>}, {transform_indices = @transform_1, window_bounds = array<i64: 16, 128>}]} {
    %c0 = arith.constant 0 : index
    %c0_0 = arith.constant 0 : index
    %c0_1 = arith.constant 0 : index
    %0 = vector.load %arg1[%c0, %c0_0, %c0_1] : memref<16x9x128xf32, #tpu.memory_space<vmem>>, vector<16x9x128xf32>
    %cst = arith.constant dense<0.000000e+00> : vector<16x128xf32>
    %1 = vector.multi_reduction <add>, %0, %cst [1] : vector<16x9x128xf32> to vector<16x128xf32>
    %c0_2 = arith.constant 0 : index
    %c0_3 = arith.constant 0 : index
    %2 = vector.load %arg2[%c0_2, %c0_3] : memref<16x128xf32, #tpu.memory_space<vmem>>, vector<16x128xf32>
    tpu.vector_store %arg2[%c0_2, %c0_3], %1 {strides = array<i32>} : memref<16x128xf32, #tpu.memory_space<vmem>>, vector<16x128xf32>,
    return
  }
  func.func @transform_0(%arg0: i32) -> (i32, i32, i32) {
    %c0_i32 = arith.constant 0 : i32
    %c0_i32_0 = arith.constant 0 : i32
    %c0_i32_1 = arith.constant 0 : i32
    return %arg0, %c0_i32, %c0_i32_0 : i32, i32, i32
  }
  func.func @transform_1(%arg0: i32) -> (i32, i32) {
    %c0_i32 = arith.constant 0 : i32
    %c0_i32_0 = arith.constant 0 : i32
    return %arg0, %c0_i32 : i32, i32
  }
}

</mosaic_0001>

<llo_original>
// kernel: tpu_custom_call.1
$region0: #{tpu_custom_call.1}
  #allocation0 [shape = 'u32[]', space=smem, size = 0x4, offset = 0x4, fixed_abs, tag = 'smem constant byte address 0x4 - core index']
  #allocation1 [shape = 'u32[144,128]{1,0:T(1,128)}', space=vmem, size = 0x12000, scoped, tag = 'internal scratch']
  %s0 = inlined_call_operand.vmem [shape: f32[16,9,128], index: 0, kind: input, shape index: {}]
  %s1 = inlined_call_operand.hbm [shape: f32[16,128], index: 1, kind: output, shape index: {}]
  %s2 = sld [smem:[#allocation0]]
  $region14: #{tpu_custom_call.1} parent=0
    _
  %s4 = ssub.s32 1, %s2
  %s5 = scalar_select 0, %s4, %s2
  $region1: #{tpu_custom_call.1} parent=0
    #allocation2 [shape = 'u8[8192]{0}', space=vmem, size = 0x2000, scoped, tag = 'output window, operand 0, single buffered']
    #allocation3 [shape = 's32[1]{0}', space=sflag, size = 0x4, scoped, tag = 'scoped memory for tpu_custom_call.1']
    %6 = vsyncpa [#allocation3], 0
    // Predicated region
    $region2: #{tpu_custom_call.1} parent=1 // pred_check
      _
    $region3: #{tpu_custom_call.1} parent=1 // pred_check_branch
      %8 = sbr.rel (0) target = $region5
    $region4: #{tpu_custom_call.1} parent=1 // pred_region
      _
    $region5: #{tpu_custom_call.1} parent=1 // pred_fallthru
      _
    %v9 = vld [vmem:[%s0] sm:$0xff]
    %v10 = vld [vmem:[%s0 + $0x8] sm:$0x1]
    %v11 = vld [vmem:[%s0 + $0x10] sm:$0xff]
    %v12 = vld [vmem:[%s0 + $0x18] sm:$0x1]
    %v13 = vld [vmem:[%s0 + $0x20] sm:$0xff]
    %v14 = vld [vmem:[%s0 + $0x28] sm:$0x1]
    %v15 = vld [vmem:[%s0 + $0x30] sm:$0xff]
    %v16 = vld [vmem:[%s0 + $0x38] sm:$0x1]
    %v17 = vld [vmem:[%s0 + $0x40] sm:$0xff]
    %v18 = vld [vmem:[%s0 + $0x48] sm:$0x1]
    %v19 = vld [vmem:[%s0 + $0x50] sm:$0xff]
    %v20 = vld [vmem:[%s0 + $0x58] sm:$0x1]
    %v21 = vld [vmem:[%s0 + $0x60] sm:$0xff]
    %v22 = vld [vmem:[%s0 + $0x68] sm:$0x1]
    %v23 = vld [vmem:[%s0 + $0x70] sm:$0xff]
    %v24 = vld [vmem:[%s0 + $0x78] sm:$0x1]
    %v25 = vld [vmem:[%s0 + $0x80] sm:$0xff]
    %v26 = vld [vmem:[%s0 + $0x88] sm:$0x1]
    %v27 = vld [vmem:[%s0 + $0x90] sm:$0xff]
    %v28 = vld [vmem:[%s0 + $0x98] sm:$0x1]
    %v29 = vld [vmem:[%s0 + $0xa0] sm:$0xff]
    %v30 = vld [vmem:[%s0 + $0xa8] sm:$0x1]
    %v31 = vld [vmem:[%s0 + $0xb0] sm:$0xff]
    %v32 = vld [vmem:[%s0 + $0xb8] sm:$0x1]
    %v33 = vld [vmem:[%s0 + $0xc0] sm:$0xff]
    %v34 = vld [vmem:[%s0 + $0xc8] sm:$0x1]
    %v35 = vld [vmem:[%s0 + $0xd0] sm:$0xff]
    %v36 = vld [vmem:[%s0 + $0xd8] sm:$0x1]
    %v37 = vld [vmem:[%s0 + $0xe0] sm:$0xff]
    %v38 = vld [vmem:[%s0 + $0xe8] sm:$0x1]
    %v39 = vld [vmem:[%s0 + $0xf0] sm:$0xff]
    %v40 = vld [vmem:[%s0 + $0xf8] sm:$0x1]
    %vm41 = vcmask 1040384
    %v42 = vsel %vm41, %v10, 0.0
    %v43 = vadd.f32 %v9, %v42
    %v44 = vrot.slane %v43, 4
    %v45 = vadd.f32 %v43, %v44
    %v46 = vrot.slane %v45, 2
    %v47 = vadd.f32 %v45, %v46
    %v48 = vrot.slane %v47, 1
    %v49 = vadd.f32 %v47, %v48
    %v50 = vsel %vm41, %v12, 0.0
    %v51 = vadd.f32 %v11, %v50
    %v52 = vrot.slane %v51, 4
    %v53 = vadd.f32 %v51, %v52
    %v54 = vrot.slane %v53, 2
    %v55 = vadd.f32 %v53, %v54
    %v56 = vrot.slane %v55, 1
    %v57 = vadd.f32 %v55, %v56
    %v58 = vsel %vm41, %v14, 0.0
    %v59 = vadd.f32 %v13, %v58
    %v60 = vrot.slane %v59, 4
    %v61 = vadd.f32 %v59, %v60
    %v62 = vrot.slane %v61, 2
    %v63 = vadd.f32 %v61, %v62
    %v64 = vrot.slane %v63, 1
    %v65 = vadd.f32 %v63, %v64
    %v66 = vsel %vm41, %v16, 0.0
    %v67 = vadd.f32 %v15, %v66
    %v68 = vrot.slane %v67, 4
    %v69 = vadd.f32 %v67, %v68
    %v70 = vrot.slane %v69, 2
    %v71 = vadd.f32 %v69, %v70
    %v72 = vrot.slane %v71, 1
    %v73 = vadd.f32 %v71, %v72
    %v74 = vsel %vm41, %v18, 0.0
    %v75 = vadd.f32 %v17, %v74
    %v76 = vrot.slane %v75, 4
    %v77 = vadd.f32 %v75, %v76
    %v78 = vrot.slane %v77, 2
    %v79 = vadd.f32 %v77, %v78
    %v80 = vrot.slane %v79, 1
    %v81 = vadd.f32 %v79, %v80
    %v82 = vsel %vm41, %v20, 0.0
    %v83 = vadd.f32 %v19, %v82
    %v84 = vrot.slane %v83, 4
    %v85 = vadd.f32 %v83, %v84
    %v86 = vrot.slane %v85, 2
    %v87 = vadd.f32 %v85, %v86
    %v88 = vrot.slane %v87, 1
    %v89 = vadd.f32 %v87, %v88
    %v90 = vsel %vm41, %v22, 0.0
    %v91 = vadd.f32 %v21, %v90
    %v92 = vrot.slane %v91, 4
    %v93 = vadd.f32 %v91, %v92
    %v94 = vrot.slane %v93, 2
    %v95 = vadd.f32 %v93, %v94
    %v96 = vrot.slane %v95, 1
    %v97 = vadd.f32 %v95, %v96
    %v98 = vsel %vm41, %v24, 0.0
    %v99 = vadd.f32 %v23, %v98
    %v100 = vrot.slane %v99, 4
    %v101 = vadd.f32 %v99, %v100
    %v102 = vrot.slane %v101, 2
    %v103 = vadd.f32 %v101, %v102
    %v104 = vrot.slane %v103, 1
    %v105 = vadd.f32 %v103, %v104
    %v106 = vsel %vm41, %v26, 0.0
    %v107 = vadd.f32 %v25, %v106
    %v108 = vrot.slane %v107, 4
    %v109 = vadd.f32 %v107, %v108
    %v110 = vrot.slane %v109, 2
    %v111 = vadd.f32 %v109, %v110
    %v112 = vrot.slane %v111, 1
    %v113 = vadd.f32 %v111, %v112
    %v114 = vsel %vm41, %v28, 0.0
    %v115 = vadd.f32 %v27, %v114
    %v116 = vrot.slane %v115, 4
    %v117 = vadd.f32 %v115, %v116
    %v118 = vrot.slane %v117, 2
    %v119 = vadd.f32 %v117, %v118
    %v120 = vrot.slane %v119, 1
    %v121 = vadd.f32 %v119, %v120
    %v122 = vsel %vm41, %v30, 0.0
    %v123 = vadd.f32 %v29, %v122
    %v124 = vrot.slane %v123, 4
    %v125 = vadd.f32 %v123, %v124
    %v126 = vrot.slane %v125, 2
    %v127 = vadd.f32 %v125, %v126
    %v128 = vrot.slane %v127, 1
    %v129 = vadd.f32 %v127, %v128
    %v130 = vsel %vm41, %v32, 0.0
    %v131 = vadd.f32 %v31, %v130
    %v132 = vrot.slane %v131, 4
    %v133 = vadd.f32 %v131, %v132
    %v134 = vrot.slane %v133, 2
    %v135 = vadd.f32 %v133, %v134
    %v136 = vrot.slane %v135, 1
    %v137 = vadd.f32 %v135, %v136
    %v138 = vsel %vm41, %v34, 0.0
    %v139 = vadd.f32 %v33, %v138
    %v140 = vrot.slane %v139, 4
    %v141 = vadd.f32 %v139, %v140
    %v142 = vrot.slane %v141, 2
    %v143 = vadd.f32 %v141, %v142
    %v144 = vrot.slane %v143, 1
    %v145 = vadd.f32 %v143, %v144
    %v146 = vsel %vm41, %v36, 0.0
    %v147 = vadd.f32 %v35, %v146
    %v148 = vrot.slane %v147, 4
    %v149 = vadd.f32 %v147, %v148
    %v150 = vrot.slane %v149, 2
    %v151 = vadd.f32 %v149, %v150
    %v152 = vrot.slane %v151, 1
    %v153 = vadd.f32 %v151, %v152
    %v154 = vsel %vm41, %v38, 0.0
    %v155 = vadd.f32 %v37, %v154
    %v156 = vrot.slane %v155, 4
    %v157 = vadd.f32 %v155, %v156
    %v158 = vrot.slane %v157, 2
    %v159 = vadd.f32 %v157, %v158
    %v160 = vrot.slane %v159, 1
    %v161 = vadd.f32 %v159, %v160
    %v162 = vsel %vm41, %v40, 0.0
    %v163 = vadd.f32 %v39, %v162
    %v164 = vrot.slane %v163, 4
    %v165 = vadd.f32 %v163, %v164
    %v166 = vrot.slane %v165, 2
    %v167 = vadd.f32 %v165, %v166
    %v168 = vrot.slane %v167, 1
    %v169 = vadd.f32 %v167, %v168
    %vm186 = vcmask 1041409
    %v187 = vsel %vm186, %v57, %v49
    %vm188 = vcmask 1042434
    %v189 = vsel %vm188, %v65, %v187
    %vm190 = vcmask 1043459
    %v191 = vsel %vm190, %v73, %v189
    %vm192 = vcmask 1044484
    %v193 = vsel %vm192, %v81, %v191
    %vm194 = vcmask 1045509
    %v195 = vsel %vm194, %v89, %v193
    %vm196 = vcmask 1046534
    %v197 = vsel %vm196, %v97, %v195
    %vm198 = vcmask 1047559
    %v199 = vsel %vm198, %v105, %v197
    %v200 = vsel %vm186, %v121, %v113
    %v201 = vsel %vm188, %v129, %v200
    %v202 = vsel %vm190, %v137, %v201
    %v203 = vsel %vm192, %v145, %v202
    %v204 = vsel %vm194, %v153, %v203
    %v205 = vsel %vm196, %v161, %v204
    %v206 = vsel %vm198, %v169, %v205
    %209 = vst [vmem:[#allocation2] sm:$0xff] %v199
    %210 = vst [vmem:[#allocation2 + $0x8] sm:$0xff] %v206
    // Predicated region
    $region6: #{tpu_custom_call.1} parent=1 // pred_check
      _
    $region7: #{tpu_custom_call.1} parent=1 // pred_check_branch
      %212 = sbr.rel (0) target = $region9
    $region8: #{tpu_custom_call.1} parent=1 // pred_region
      %s214 = ssub.s32 256, 256
      %215 = vsyncadd [#allocation3], %s214
      %s216 = sshll.u32 [#allocation2], 4
      %s217 = int_to_ptr.vmem [resolvable:$true] %s216
      %222 = dma.vmem_to_hbm [thread:$0]  %s217, 256, %s1, [#allocation3], 128, 128, 8
    $region9: #{tpu_custom_call.1} parent=1 // pred_fallthru
      _
    // Predicated region
    $region10: #{tpu_custom_call.1} parent=1 // pred_check
      _
    $region11: #{tpu_custom_call.1} parent=1 // pred_check_branch
      %224 = sbr.rel (0) target = $region13
    $region12: #{tpu_custom_call.1} parent=1 // pred_region
      %225 = dma.done [#allocation3], 256
    $region13: #{tpu_custom_call.1} parent=1 // pred_fallthru
      _
    %226 = vsyncpa [#allocation3], 1

</llo_original>
